<compile_context>
chip_gen: v7x
topology: tpu7x:2x2x1
jax: 0.10.0
libtpu: 0.0.40
codegen_flags: <defaults>
</compile_context>

<pallas_src>
import functools

import numpy as np
import jax
import jax.numpy as jnp
from jax.experimental import pallas as pl
from jax.experimental.pallas import tpu as pltpu


# ----------------------------------------------------------------------------- helpers
def _rup(x, m):
    return ((x + m - 1) // m) * m


def _row_tiles(m):
    """Row tile and padded row count: full-dim block if small, else 256-row tiles."""
    if m > 256:
        return 256, _rup(m, 256)
    return m, m


# ------------------------------------------------------------------ Pallas kernel bodies
def _mm_simple_kernel(a_ref, b_ref, bias_ref, o_ref, *, relu_in, relu_out):
    a = a_ref[...]
    if relu_in:
        a = jnp.maximum(a, 0.0)
    y = jnp.dot(a, b_ref[...], preferred_element_type=jnp.float32)
    y = y + bias_ref[...]
    if relu_out:
        y = jnp.maximum(y, 0.0)
    o_ref[...] = y


def _mm_acc_kernel(a_ref, b_ref, bias_ref, o_ref, acc_ref, *, relu_in, relu_out):
    @pl.when(pl.program_id(1) == 0)
    def _():
        acc_ref[...] = jnp.zeros_like(acc_ref)

    a = a_ref[...]
    if relu_in:
        a = jnp.maximum(a, 0.0)
    acc_ref[...] += jnp.dot(a, b_ref[...], preferred_element_type=jnp.float32)

    @pl.when(pl.program_id(1) == pl.num_programs(1) - 1)
    def _():
        y = acc_ref[...] + bias_ref[...]
        if relu_out:
            y = jnp.maximum(y, 0.0)
        o_ref[...] = y


def _affine_kernel(x_ref, s_ref, b_ref, o_ref, *, relu):
    y = x_ref[...] * s_ref[...] + b_ref[...]
    if relu:
        y = jnp.maximum(y, 0.0)
    o_ref[...] = y


def _pool_kernel(x_ref, o_ref, *, kk, mode):
    acc = x_ref[0]                                    # (TM, C) tap slab
    for t in range(1, kk):
        v = x_ref[t]
        acc = jnp.maximum(acc, v) if mode == "max" else acc + v
    o_ref[...] = acc


def _dwconv_kernel(x_ref, w_ref, o_ref, *, kk, relu):
    acc = None
    for t in range(kk):
        v = x_ref[t]                                  # (TM, C)
        if relu:
            v = jnp.maximum(v, 0.0)
        term = v * w_ref[t]                           # (1, C) broadcast along rows
        acc = term if acc is None else acc + term
    o_ref[...] = acc


# ------------------------------------------------------------------ Pallas call wrappers
_VMEM_LIMIT = 32 * 1024 * 1024


def matmul_pallas(a, b, *, relu_in=False, bias=None, relu_out=False):
    """(M,K)@(K,N) on the MXU: bf16 operands, f32 accumulation, fused relu/bias epilogue."""
    M, K = a.shape
    _, N = b.shape
    TM, Mp = _row_tiles(M)
    a16 = a.astype(jnp.bfloat16)
    b16 = b.astype(jnp.bfloat16)
    if Mp != M:
        a16 = jnp.pad(a16, ((0, Mp - M), (0, 0)))
    if bias is None:
        bias2 = jnp.zeros((1, N), jnp.float32)
    else:
        bias2 = bias.reshape(1, N).astype(jnp.float32)

    if K <= 1024:
        out = pl.pallas_call(
            functools.partial(_mm_simple_kernel, relu_in=relu_in, relu_out=relu_out),
            out_shape=jax.ShapeDtypeStruct((Mp, N), jnp.float32),
            grid=(Mp // TM,),
            in_specs=[pl.BlockSpec((TM, K), lambda i: (i, 0)),
                      pl.BlockSpec((K, N), lambda i: (0, 0)),
                      pl.BlockSpec((1, N), lambda i: (0, 0))],
            out_specs=pl.BlockSpec((TM, N), lambda i: (i, 0)),
            compiler_params=pltpu.CompilerParams(
                dimension_semantics=("parallel",),
                vmem_limit_bytes=_VMEM_LIMIT),
        )(a16, b16, bias2)
    else:
        TK = 512
        Kp = _rup(K, TK)
        if Kp != K:
            a16 = jnp.pad(a16, ((0, 0), (0, Kp - K)))
            b16 = jnp.pad(b16, ((0, Kp - K), (0, 0)))
        out = pl.pallas_call(
            functools.partial(_mm_acc_kernel, relu_in=relu_in, relu_out=relu_out),
            out_shape=jax.ShapeDtypeStruct((Mp, N), jnp.float32),
            grid=(Mp // TM, Kp // TK),
            in_specs=[pl.BlockSpec((TM, TK), lambda i, k: (i, k)),
                      pl.BlockSpec((TK, N), lambda i, k: (k, 0)),
                      pl.BlockSpec((1, N), lambda i, k: (0, 0))],
            out_specs=pl.BlockSpec((TM, N), lambda i, k: (i, 0)),
            scratch_shapes=[pltpu.VMEM((TM, N), jnp.float32)],
            compiler_params=pltpu.CompilerParams(
                dimension_semantics=("parallel", "arbitrary"),
                vmem_limit_bytes=_VMEM_LIMIT),
        )(a16, b16, bias2)
    return out if Mp == M else out[:M]


def affine_pallas(x2d, scale, shift, relu):
    """y = x * scale + shift (per channel), optional ReLU; no channel padding."""
    M, C = x2d.shape
    TM, Mp = _row_tiles(M)
    xp = x2d if Mp == M else jnp.pad(x2d, ((0, Mp - M), (0, 0)))
    out = pl.pallas_call(
        functools.partial(_affine_kernel, relu=relu),
        out_shape=jax.ShapeDtypeStruct((Mp, C), jnp.float32),
        grid=(Mp // TM,),
        in_specs=[pl.BlockSpec((TM, C), lambda i: (i, 0)),
                  pl.BlockSpec((1, C), lambda i: (0, 0)),
                  pl.BlockSpec((1, C), lambda i: (0, 0))],
        out_specs=pl.BlockSpec((TM, C), lambda i: (i, 0)),
        compiler_params=pltpu.CompilerParams(dimension_semantics=("parallel",)),
    )(xp, scale.reshape(1, C), shift.reshape(1, C))
    return out if Mp == M else out[:M]


def pool_reduce_pallas(patches, mode):
    """Reduce (KK, M, C) over the leading tap axis with max or sum."""
    kk, m, c = patches.shape
    tm, mp = _row_tiles(m)
    if mp != m:
        patches = jnp.pad(patches, ((0, 0), (0, mp - m), (0, 0)),
                          constant_values=(-1e30 if mode == "max" else 0.0))
    out = pl.pallas_call(
        functools.partial(_pool_kernel, kk=kk, mode=mode),
        out_shape=jax.ShapeDtypeStruct((mp, c), jnp.float32),
        grid=(mp // tm,),
        in_specs=[pl.BlockSpec((kk, tm, c), lambda i: (0, i, 0))],
        out_specs=pl.BlockSpec((tm, c), lambda i: (i, 0)),
        compiler_params=pltpu.CompilerParams(dimension_semantics=("parallel",)),
    )(patches)
    return out if mp == m else out[:m]


def depthwise_pallas(patches, w_taps, relu_in):
    """Depthwise conv as per-tap VPU multiply-add: patches (KK, M, C), w_taps (KK, 1, C)."""
    kk, m, c = patches.shape
    tm, mp = _row_tiles(m)
    if mp != m:
        patches = jnp.pad(patches, ((0, 0), (0, mp - m), (0, 0)))
    out = pl.pallas_call(
        functools.partial(_dwconv_kernel, kk=kk, relu=relu_in),
        out_shape=jax.ShapeDtypeStruct((mp, c), jnp.float32),
        grid=(mp // tm,),
        in_specs=[pl.BlockSpec((kk, tm, c), lambda i: (0, i, 0)),
                  pl.BlockSpec((kk, 1, c), lambda i: (0, 0, 0))],
        out_specs=pl.BlockSpec((tm, c), lambda i: (i, 0)),
        compiler_params=pltpu.CompilerParams(dimension_semantics=("parallel",)),
    )(patches, w_taps)
    return out if mp == m else out[:m]


# ------------------------------------------------------------------ im2col / patch glue
def extract_patches_tapfirst(x, kh, kw, stride, pad, dilation, pad_value):
    """x: (N,H,W,C) -> (kh*kw, N*Ho*Wo, C) patches with the tap axis leading."""
    n, h, w_, c = x.shape
    if pad > 0:
        x = jnp.pad(x, ((0, 0), (pad, pad), (pad, pad), (0, 0)), constant_values=pad_value)
    hp, wp = h + 2 * pad, w_ + 2 * pad
    ho = (hp - dilation * (kh - 1) - 1) // stride + 1
    wo = (wp - dilation * (kw - 1) - 1) // stride + 1
    taps = []
    for i in range(kh):
        for j in range(kw):
            r0, c0 = i * dilation, j * dilation
            taps.append(x[:, r0:r0 + (ho - 1) * stride + 1:stride,
                             c0:c0 + (wo - 1) * stride + 1:stride, :].reshape(n * ho * wo, c))
    return jnp.stack(taps, axis=0), ho, wo


def _im2col(x, kh, kw, stride, pad, dilation):
    """x: (N,H,W,C) -> (N*Ho*Wo, kh*kw*C) matrix (tap-major, channel-minor)."""
    n, h, w_, c = x.shape
    if pad > 0:
        x = jnp.pad(x, ((0, 0), (pad, pad), (pad, pad), (0, 0)))
    hp, wp = h + 2 * pad, w_ + 2 * pad
    ho = (hp - dilation * (kh - 1) - 1) // stride + 1
    wo = (wp - dilation * (kw - 1) - 1) // stride + 1
    cols = []
    for i in range(kh):
        for j in range(kw):
            r0, c0 = i * dilation, j * dilation
            cols.append(x[:, r0:r0 + (ho - 1) * stride + 1:stride,
                             c0:c0 + (wo - 1) * stride + 1:stride, :])
    a = jnp.concatenate(cols, axis=-1).reshape(n * ho * wo, kh * kw * c)
    return a, ho, wo


# ------------------------------------------------------------------ neural-net building ops
@functools.partial(jax.jit,
                   static_argnames=("stride", "pad", "dilation", "groups",
                                    "relu_in", "relu_out"))
def conv2d(x, w, bias=None, *, stride=1, pad=0, dilation=1, groups=1,
           relu_in=False, relu_out=False):
    """x: NHWC, w: torch-style OIHW. Fused input-ReLU and bias/ReLU epilogue."""
    n, h, width, c = x.shape
    cout, cin_g, kh, kw = w.shape
    if groups != 1:
        # depthwise: groups == C, cin_g == 1, cout == C
        pats, ho, wo = extract_patches_tapfirst(x, kh, kw, stride, pad, dilation, 0.0)
        w_taps = w.reshape(c, kh * kw).T.reshape(kh * kw, 1, c)
        y = depthwise_pallas(pats, w_taps, relu_in)
        return y.reshape(n, ho, wo, c)
    if kh == 1 and kw == 1 and pad == 0:
        xs = x[:, ::stride, ::stride, :]
        ho, wo = xs.shape[1], xs.shape[2]
        a = xs.reshape(n * ho * wo, c)
        b = w.reshape(cout, c).T
    else:
        a, ho, wo = _im2col(x, kh, kw, stride, pad, dilation)
        b = jnp.transpose(w, (2, 3, 1, 0)).reshape(kh * kw * cin_g, cout)
    y = matmul_pallas(a, b, relu_in=relu_in, bias=bias, relu_out=relu_out)
    return y.reshape(n, ho, wo, cout)


@functools.partial(jax.jit, static_argnames=("relu",))
def batchnorm(x, weight=None, *, relu=False):
    """Training-mode BatchNorm2d (batch stats, eps=1e-5, affine identity).

    `weight` (the architecture weight of a MixedOp branch) is folded into scale/shift.
    """
    n, h, w, c = x.shape
    xf = x.reshape(-1, c)
    mean = jnp.mean(xf, axis=0)
    var = jnp.mean(jnp.square(xf - mean[None, :]), axis=0)        # biased, as PyTorch uses
    scale = jax.lax.rsqrt(var + 1e-5)
    shift = -mean * scale
    if weight is not None:
        scale = scale * weight
        shift = shift * weight
    return affine_pallas(xf, scale, shift, relu).reshape(n, h, w, c)


@functools.partial(jax.jit, static_argnames=("k", "stride", "pad"))
def max_pool(x, *, k, stride, pad):
    n, h, w, c = x.shape
    pats, ho, wo = extract_patches_tapfirst(x, k, k, stride, pad, 1, -1e30)
    return pool_reduce_pallas(pats, "max").reshape(n, ho, wo, c)


@functools.lru_cache(maxsize=None)
def _avg_pool_divisor(h, w, stride):
    """Static count_include_pad=False divisor map for 3x3 / pad 1 avg pooling."""
    ones = np.zeros((h + 2, w + 2), np.float32)
    ones[1:h + 1, 1:w + 1] = 1.0
    ho = (h + 2 - 3) // stride + 1
    wo = (w + 2 - 3) // stride + 1
    cnt = np.zeros((ho, wo), np.float32)
    for i in range(3):
        for j in range(3):
            cnt += ones[i:i + (ho - 1) * stride + 1:stride, j:j + (wo - 1) * stride + 1:stride]
    return (1.0 / cnt).reshape(1, ho, wo, 1)


@functools.partial(jax.jit, static_argnames=("stride",))
def avg_pool_3x3(x, *, stride):
    n, h, w, c = x.shape
    pats, ho, wo = extract_patches_tapfirst(x, 3, 3, stride, 1, 1, 0.0)
    s = pool_reduce_pallas(pats, "sum").reshape(n, ho, wo, c)
    return s * jnp.asarray(_avg_pool_divisor(h, w, stride))


# Small fused glue (single XLA fusion each; removes the (T, M, C) stack + wsum kernel).
@jax.jit
def mixed_combine(terms, id_term):
    out = terms[0]
    for t in terms[1:]:
        out = out + t
    if id_term is not None:
        wgt, x = id_term
        out = out + wgt * x
    return out


@jax.jit
def weighted_add(ws, xs):
    out = ws[0] * xs[0]
    for wgt, x in zip(ws[1:], xs[1:]):
        out = out + wgt * x
    return out


@functools.partial(jax.jit, static_argnames=("groups",))
def concat_shuffle(a, b, *, groups):
    x = jnp.concatenate([a, b], axis=-1)
    n, h, w, c = x.shape
    x = x.reshape(n, h, w, groups, c // groups)
    x = jnp.transpose(x, (0, 1, 2, 4, 3))
    return x.reshape(n, h, w, c)


@jax.jit
def cat_last(xs):
    return jnp.concatenate(xs, axis=-1)


@jax.jit
def split_channels_quarter(x):
    c = x.shape[-1]
    return x[..., :c // 4], x[..., c // 4:]


# ------------------------------------------------------------------ DARTS ops / modules
PRIMITIVES = ['none', 'max_pool_3x3', 'avg_pool_3x3', 'skip_connect',
              'sep_conv_3x3', 'sep_conv_5x5', 'dil_conv_3x3', 'dil_conv_5x5']


class Init:
    def __init__(self, seed=0):
        self.rng = np.random.RandomState(seed)

    def conv(self, cout, cin, kh, kw):
        std = (2.0 / float(cin * kh * kw)) ** 0.5
        return jnp.asarray(self.rng.randn(cout, cin, kh, kw).astype(np.float32) * std)

    def vec(self, n, std):
        return jnp.asarray(self.rng.randn(n).astype(np.float32) * std)

    def mat(self, r, c, std):
        return jnp.asarray(self.rng.randn(r, c).astype(np.float32) * std)


class PoolBN:
    """pool op + BatchNorm2d(affine=False); the arch weight is folded into the BN."""

    def __init__(self, kind, stride):
        self.kind, self.stride = kind, stride

    def __call__(self, x, weight=None):
        if self.kind == "max":
            y = max_pool(x, k=3, stride=self.stride, pad=1)
        else:
            y = avg_pool_3x3(x, stride=self.stride)
        return batchnorm(y, weight)


class ReLUConvBN:
    def __init__(self, ini, c_in, c_out, k, stride, pad):
        self.w = ini.conv(c_out, c_in, k, k)
        self.stride, self.pad = stride, pad

    def __call__(self, x, weight=None):
        y = conv2d(x, self.w, stride=self.stride, pad=self.pad, relu_in=True)
        return batchnorm(y, weight)


class FactorizedReduce:
    def __init__(self, ini, c_in, c_out):
        assert c_out % 2 == 0
        self.w1 = ini.conv(c_out // 2, c_in, 1, 1)
        self.w2 = ini.conv(c_out // 2, c_in, 1, 1)

    def __call__(self, x, weight=None):
        a = conv2d(x, self.w1, stride=2, relu_in=True)
        b = conv2d(x[:, 1:, 1:, :], self.w2, stride=2, relu_in=True)
        return batchnorm(cat_last((a, b)), weight)


class SepConv:
    def __init__(self, ini, c_in, c_out, k, stride, pad):
        self.c_in, self.stride, self.pad = c_in, stride, pad
        self.dw1 = ini.conv(c_in, 1, k, k)
        self.pw1 = ini.conv(c_in, c_in, 1, 1)
        self.dw2 = ini.conv(c_in, 1, k, k)
        self.pw2 = ini.conv(c_out, c_in, 1, 1)

    def __call__(self, x, weight=None):
        x = conv2d(x, self.dw1, stride=self.stride, pad=self.pad,
                   groups=self.c_in, relu_in=True)
        x = conv2d(x, self.pw1)
        x = batchnorm(x)
        x = conv2d(x, self.dw2, stride=1, pad=self.pad,
                   groups=self.c_in, relu_in=True)
        x = conv2d(x, self.pw2)
        return batchnorm(x, weight)


class DilConv:
    def __init__(self, ini, c_in, c_out, k, stride, pad, dilation):
        self.c_in, self.stride, self.pad, self.dil = c_in, stride, pad, dilation
        self.dw = ini.conv(c_in, 1, k, k)
        self.pw = ini.conv(c_out, c_in, 1, 1)

    def __call__(self, x, weight=None):
        x = conv2d(x, self.dw, stride=self.stride, pad=self.pad,
                   dilation=self.dil, groups=self.c_in, relu_in=True)
        x = conv2d(x, self.pw)
        return batchnorm(x, weight)


class MixedOp:
    def __init__(self, ini, c, stride):
        self.k = 4
        self.stride = stride
        cb = c // self.k
        self._branches = []
        for p in PRIMITIVES:
            if p == 'none':
                op = None                                          # contributes exactly 0
            elif p == 'max_pool_3x3':
                op = PoolBN('max', stride)
            elif p == 'avg_pool_3x3':
                op = PoolBN('avg', stride)
            elif p == 'skip_connect':
                op = None if stride == 1 else FactorizedReduce(ini, cb, cb)
            elif p == 'sep_conv_3x3':
                op = SepConv(ini, cb, cb, 3, stride, 1)
            elif p == 'sep_conv_5x5':
                op = SepConv(ini, cb, cb, 5, stride, 2)
            elif p == 'dil_conv_3x3':
                op = DilConv(ini, cb, cb, 3, stride, 2, 2)
            elif p == 'dil_conv_5x5':
                op = DilConv(ini, cb, cb, 5, stride, 4, 2)
            else:
                raise ValueError(p)
            self._branches.append((p, op))

    def __call__(self, x, weights):
        """weights: list of len(PRIMITIVES) scalar arrays (softmaxed alpha row)."""
        xtemp, xtemp2 = split_channels_quarter(x)
        terms, id_term = [], None
        for t, (p, op) in enumerate(self._branches):
            if p == 'none':
                continue                                           # w * 0 == 0
            if p == 'skip_connect' and self.stride == 1:
                id_term = (weights[t], xtemp)                      # identity: w * x
                continue
            terms.append(op(xtemp, weights[t]))                    # w folded into final BN
        temp1 = mixed_combine(tuple(terms), id_term)
        if temp1.shape[1] == x.shape[1]:
            other = xtemp2
        else:
            # TODO(synk): MaxPool2d(2,2,ceil_mode=True) of Cell_ceil equals floor mode for the
            # even spatial sizes used here; Ceil_OPS definitions are not in the source.
            other = max_pool(xtemp2, k=2, stride=2, pad=0)
        return concat_shuffle(temp1, other, groups=self.k)


class Cell:
    def __init__(self, ini, steps, multiplier, cpp, cp, c, reduction, reduction_prev):
        self.reduction = reduction
        self._steps, self._multiplier = steps, multiplier
        if reduction_prev:
            self.pre0 = FactorizedReduce(ini, cpp, c)
        else:
            self.pre0 = ReLUConvBN(ini, cpp, c, 1, 1, 0)
        self.pre1 = ReLUConvBN(ini, cp, c, 1, 1, 0)
        self._ops = []
        for i in range(steps):
            for j in range(2 + i):
                stride = 2 if reduction and j < 2 else 1
                self._ops.append(MixedOp(ini, c, stride))

    def __call__(self, s0, s1, alpha_rows, beta_w):
        s0 = self.pre0(s0)
        s1 = self.pre1(s1)
        states = [s0, s1]
        offset = 0
        for _ in range(self._steps):
            outs = tuple(self._ops[offset + j](h, alpha_rows[offset + j])
                         for j, h in enumerate(states))
            s = weighted_add(tuple(beta_w[offset + j] for j in range(len(states))), outs)
            offset += len(states)
            states.append(s)
        return cat_last(tuple(states[-self._multiplier:]))


class DARTSBase:
    def __init__(self, seed=0):
        ini = Init(seed)
        self._C, self._steps, self._multiplier = 16, 4, 4
        self.stem_w = ini.conv(16, 3, 3, 3)          # stem: Conv3x3 (no bias) + BN (gamma=1,beta=0)
        cells_cfg = [
            (16, 16, 16, False, False),
            (16, 64, 16, False, False),
            (64, 64, 32, True, False),
            (64, 128, 32, False, True),
            (128, 128, 32, False, False),
            (128, 128, 64, True, False),
            (128, 256, 64, False, True),
            (256, 256, 64, False, False),
            (256, 256, 128, True, False),            # Cell_ceil (see TODO in MixedOp)
            (256, 512, 128, False, True),
            (512, 512, 128, False, False),
            (512, 512, 128, True, False),
            (512, 512, 128, False, True),
            (512, 512, 128, False, False),
        ]
        self.cells = [Cell(ini, 4, 4, cpp, cp, c, red, red_prev)
                      for (cpp, cp, c, red, red_prev) in cells_cfg]
        self.conv6_w = ini.conv(1024, 512, 3, 3)
        self.conv6_b = ini.vec(1024, 0.01)
        self.conv7_w = ini.conv(1024, 1024, 1, 1)
        self.conv7_b = ini.vec(1024, 0.01)
        k = sum(1 for i in range(self._steps) for _ in range(2 + i))
        self.alphas_normal = ini.mat(k, len(PRIMITIVES), 0.001)
        self.alphas_reduce = ini.mat(k, len(PRIMITIVES), 0.001)
        self.betas_normal = ini.vec(k, 0.001)
        self.betas_reduce = ini.vec(k, 0.001)

    @staticmethod
    def _beta_weights(betas, steps=4):
        parts = [jax.nn.softmax(betas[0:2])]
        n, start = 3, 2
        for _ in range(steps - 1):
            parts.append(jax.nn.softmax(betas[start:start + n]))
            start += n
            n += 1
        return jnp.concatenate(parts, axis=0)

    def forward(self, image_nchw):
        x = jnp.transpose(image_nchw, (0, 2, 3, 1)).astype(jnp.float32)   # NCHW -> NHWC
        s = conv2d(x, self.stem_w, stride=1, pad=1)
        s = batchnorm(s)
        s0 = s1 = s

        k, n_ops = self.alphas_normal.shape
        wn = jax.nn.softmax(self.alphas_normal, axis=-1)
        wr = jax.nn.softmax(self.alphas_reduce, axis=-1)
        wn2 = self._beta_weights(self.betas_normal)
        wr2 = self._beta_weights(self.betas_reduce)
        # Split the arch weights into scalar handles once per forward (reused by all cells)
        # so they can be folded into the BN affine of each branch.
        wn_rows = [[wn[i, t] for t in range(n_ops)] for i in range(k)]
        wr_rows = [[wr[i, t] for t in range(n_ops)] for i in range(k)]
        wn2_l = [wn2[i] for i in range(k)]
        wr2_l = [wr2[i] for i in range(k)]

        conv4_3 = None
        for idx, cell in enumerate(self.cells):
            rows, bw = (wr_rows, wr2_l) if cell.reduction else (wn_rows, wn2_l)
            s0, s1 = s1, cell(s0, s1, rows, bw)
            if idx == 10:                     # after cell11
                conv4_3 = s1

        out = max_pool(s1, k=3, stride=1, pad=1)                               # pool5
        out = conv2d(out, self.conv6_w, self.conv6_b,
                     stride=1, pad=6, dilation=6, relu_out=True)               # relu(conv6)
        conv7 = conv2d(out, self.conv7_w, self.conv7_b, relu_out=True)         # relu(conv7)
        return (jnp.transpose(conv4_3, (0, 3, 1, 2)),                          # back to NCHW
                jnp.transpose(conv7, (0, 3, 1, 2)))


# ----------------------------------------------------------------------------- main
if __name__ == "__main__":
    model = DARTSBase(seed=0)
    key = jax.random.PRNGKey(0)
    image = jax.random.normal(key, (2, 3, 16, 16), jnp.float32)   # NCHW, like PyTorch input
    conv4_3_feats, conv7_feats = model.forward(image)
    conv4_3_feats = jax.block_until_ready(conv4_3_feats)
    conv7_feats = jax.block_until_ready(conv7_feats)
    assert conv4_3_feats.shape == (2, 512, 2, 2), conv4_3_feats.shape
    assert conv7_feats.shape == (2, 1024, 1, 1), conv7_feats.shape
    assert bool(jnp.all(jnp.isfinite(conv4_3_feats))) and bool(jnp.all(jnp.isfinite(conv7_feats)))
    print("KERNEL_OK")
</pallas_src>

<mosaic_0001>
module attributes {stable_mosaic.version = 11 : i64} {
  func.func @_mm_simple_kernel(%arg0: i32, %arg1: memref<256x27xbf16, #tpu.memory_space<vmem>>, %arg2: memref<27x16xbf16, #tpu.memory_space<vmem>>, %arg3: memref<1x16xf32, #tpu.memory_space<vmem>>, %arg4: memref<256x16xf32, #tpu.memory_space<vmem>>) attributes {dimension_semantics = [#tpu.dimension_semantics<parallel>], iteration_bounds = array<i64: 2>, scalar_prefetch = 0 : i64, scratch_operands = 0 : i64, tpu.core_type = #tpu.core_type<tc>, window_params = [{transform_indices = @transform_0, window_bounds = array<i64: 256, 27>}, {pipeline_mode = #tpu.pipeline_mode<synchronous>, transform_indices = @transform_1, window_bounds = array<i64: 27, 16>}, {pipeline_mode = #tpu.pipeline_mode<synchronous>, transform_indices = @transform_2, window_bounds = array<i64: 1, 16>}, {transform_indices = @transform_3, window_bounds = array<i64: 256, 16>}]} {
    %c0 = arith.constant 0 : index
    %c0_0 = arith.constant 0 : index
    %0 = vector.load %arg1[%c0, %c0_0] : memref<256x27xbf16, #tpu.memory_space<vmem>>, vector<256x27xbf16>
    %c0_1 = arith.constant 0 : index
    %c0_2 = arith.constant 0 : index
    %1 = vector.load %arg2[%c0_1, %c0_2] : memref<27x16xbf16, #tpu.memory_space<vmem>>, vector<27x16xbf16>
    %cst = arith.constant dense<0.000000e+00> : vector<256x16xf32>
    %2 = tpu.matmul %0, %1, %cst {dimension_numbers = #tpu.dot_dimension_numbers<[1], [0], [0], [1], [0, 0, 1, 1], [], []>} : vector<256x27xbf16>, vector<27x16xbf16>, vector<256x16xf32> -> vector<256x16xf32>
    %c0_3 = arith.constant 0 : index
    %c0_4 = arith.constant 0 : index
    %3 = vector.load %arg3[%c0_3, %c0_4] : memref<1x16xf32, #tpu.memory_space<vmem>>, vector<1x16xf32>
    %4 = vector.broadcast %3 : vector<1x16xf32> to vector<256x16xf32>
    %5 = arith.addf %2, %4 : vector<256x16xf32>
    %c0_5 = arith.constant 0 : index
    %c0_6 = arith.constant 0 : index
    %6 = vector.load %arg4[%c0_5, %c0_6] : memref<256x16xf32, #tpu.memory_space<vmem>>, vector<256x16xf32>
    tpu.vector_store %arg4[%c0_5, %c0_6], %5 {strides = array<i32>} : memref<256x16xf32, #tpu.memory_space<vmem>>, vector<256x16xf32>,
    return
  }
  func.func @transform_0(%arg0: i32) -> (i32, i32) {
    %c0_i32 = arith.constant 0 : i32
    %c0_i32_0 = arith.constant 0 : i32
    return %arg0, %c0_i32 : i32, i32
  }
  func.func @transform_1(%arg0: i32) -> (i32, i32) {
    %c0_i32 = arith.constant 0 : i32
    %c0_i32_0 = arith.constant 0 : i32
    %c0_i32_1 = arith.constant 0 : i32
    return %c0_i32, %c0_i32_0 : i32, i32
  }
  func.func @transform_2(%arg0: i32) -> (i32, i32) {
    %c0_i32 = arith.constant 0 : i32
    %c0_i32_0 = arith.constant 0 : i32
    %c0_i32_1 = arith.constant 0 : i32
    return %c0_i32, %c0_i32_0 : i32, i32
  }
  func.func @transform_3(%arg0: i32) -> (i32, i32) {
    %c0_i32 = arith.constant 0 : i32
    %c0_i32_0 = arith.constant 0 : i32
    return %arg0, %c0_i32 : i32, i32
  }
}

</mosaic_0001>

<llo_original>
// kernel: conv2d.1
$region0: #{conv2d.1}
  #allocation0 [shape = 'u32[]', space=smem, size = 0x4, offset = 0x4, fixed_abs, tag = 'smem constant byte address 0x4 - core index']
  #allocation1 [shape = 'u32[144,128]{1,0:T(1,128)}', space=vmem, size = 0x12000, scoped, tag = 'internal scratch']
  %s0 = inlined_call_operand.vmem [shape: bf16[512,27], index: 0, kind: input, shape index: {}]
  %s1 = inlined_call_operand.vmem [shape: bf16[27,16], index: 1, kind: input, shape index: {}]
  %s2 = inlined_call_operand.vmem [shape: f32[1,16], index: 2, kind: input, shape index: {}]
  %s3 = inlined_call_operand.hbm [shape: f32[512,16], index: 3, kind: output, shape index: {}]
  %s4 = sld [smem:[#allocation0]]
  $region45: #{conv2d.1} parent=0
    _
  %s6 = ssub.s32 1, %s4
  %s7 = scalar_select 0, %s6, %s4
  $region1: #{conv2d.1} parent=0
    #allocation2 [shape = 'u8[262144]{0}', space=vmem, size = 0x40000, scoped, tag = 'output window, operand 0']
    #allocation3 [shape = 's32[2]{0}', space=sflag, size = 0x8, scoped, tag = 'scoped memory for conv2d.1']
    %8 = vsyncpa [#allocation3], 0
    %s9 = scalar_lea.sflag [#allocation3], 1
    %10 = vsyncpa %s9, 0
    loop: start=0, step=1, limit=4
    $region2: #{conv2d.1} parent=1 // loop_pre_header
      _
    $region3: #{conv2d.1} parent=1 // loop_header
      %s12 = sphi 0, %s16
      %p13 = scmp.ge.s32.totalorder %s12, 4
      %s22 = sphi 0, %s24
      %s25 = sphi 0, %s22
      %s26 = sphi 0, %s25
      %s42 = sphi 0, %s26
      %s46 = sphi 0, %s46
      %s48 = sphi 0, %s46
      %s49 = sphi 0, %s48
      %s63 = sphi 0, %s49
      %s67 = sphi 0, %s67
      %s69 = sphi 0, %s67
      %s70 = sphi 0, %s69
      %s84 = sphi 0, %s70
      %s90 = sphi 0, %s92
      %s93 = sphi 0, %s90
      %s94 = sphi 0, %s93
      %s110 = sphi 0, %s94
    $region4: #{conv2d.1} parent=1 // loop_header_branch
      %15 = sbr.rel (%p13) target = $region8
    $region5: #{conv2d.1} parent=1 // loop_body
      %s17 = ssub.s32 %s12, 1
      %s18 = ssub.s32 %s12, 2
      %s19 = sadd.s32 %s12, 1
      %s20 = ssub.s32 %s12, %s19
      %p21 = scmp.eq.s32.totalorder %s20, 0
      %s23 = sadd.s32 %s22, 1
      %s24 = scalar_select %p21, %s22, %s23
      %p27 = pneg %p21
      %p28 = scmp.eq.s32.totalorder %s12, 1
      %p29 = por %p27, %p28
      %p30 = scmp.ne.s32.totalorder %s22, %s25
      %p31 = scmp.eq.s32.totalorder %s12, 0
      %p32 = por %p30, %p31
      %p33 = scmp.ne.s32.totalorder %s22, %s25
      %p34 = scmp.eq.s32.totalorder %s17, 1
      %p35 = por %p33, %p34
      %p36 = scmp.ne.s32.totalorder %s25, %s26
      %p37 = scmp.eq.s32.totalorder %s17, 0
      %p38 = por %p36, %p37
      %p39 = scmp.ne.s32.totalorder %s25, %s26
      %p40 = scmp.eq.s32.totalorder %s18, 1
      %p41 = por %p39, %p40
      %p43 = scmp.ne.s32.totalorder %s26, %s42
      %p44 = scmp.eq.s32.totalorder %s18, 0
      %p45 = por %p43, %p44
      %s47 = sadd.s32 %s46, 1
      %p50 = scmp.eq.s32.totalorder %s12, 1
      %p51 = scmp.ne.s32.totalorder %s46, %s48
      %p52 = scmp.eq.s32.totalorder %s12, 0
      %p53 = por %p51, %p52
      %p54 = scmp.ne.s32.totalorder %s46, %s48
      %p55 = scmp.eq.s32.totalorder %s17, 1
      %p56 = por %p54, %p55
      %p57 = scmp.ne.s32.totalorder %s48, %s49
      %p58 = scmp.eq.s32.totalorder %s17, 0
      %p59 = por %p57, %p58
      %p60 = scmp.ne.s32.totalorder %s48, %s49
      %p61 = scmp.eq.s32.totalorder %s18, 1
      %p62 = por %p60, %p61
      %p64 = scmp.ne.s32.totalorder %s49, %s63
      %p65 = scmp.eq.s32.totalorder %s18, 0
      %p66 = por %p64, %p65
      %s68 = sadd.s32 %s67, 1
      %p71 = scmp.eq.s32.totalorder %s12, 1
      %p72 = scmp.ne.s32.totalorder %s67, %s69
      %p73 = scmp.eq.s32.totalorder %s12, 0
      %p74 = por %p72, %p73
      %p75 = scmp.ne.s32.totalorder %s67, %s69
      %p76 = scmp.eq.s32.totalorder %s17, 1
      %p77 = por %p75, %p76
      %p78 = scmp.ne.s32.totalorder %s69, %s70
      %p79 = scmp.eq.s32.totalorder %s17, 0
      %p80 = por %p78, %p79
      %p81 = scmp.ne.s32.totalorder %s69, %s70
      %p82 = scmp.eq.s32.totalorder %s18, 1
      %p83 = por %p81, %p82
      %p85 = scmp.ne.s32.totalorder %s70, %s84
      %p86 = scmp.eq.s32.totalorder %s18, 0
      %p87 = por %p85, %p86
      %s88 = ssub.s32 %s12, %s19
      %p89 = scmp.eq.s32.totalorder %s88, 0
      %s91 = sadd.s32 %s90, 1
      %s92 = scalar_select %p89, %s90, %s91
      %p95 = pneg %p89
      %p96 = scmp.eq.s32.totalorder %s12, 1
      %p97 = por %p95, %p96
      %p98 = scmp.ne.s32.totalorder %s90, %s93
      %p99 = scmp.eq.s32.totalorder %s12, 0
      %p100 = por %p98, %p99
      %p101 = scmp.ne.s32.totalorder %s90, %s93
      %p102 = scmp.eq.s32.totalorder %s17, 1
      %p103 = por %p101, %p102
      %p104 = scmp.ne.s32.totalorder %s93, %s94
      %p105 = scmp.eq.s32.totalorder %s17, 0
      %p106 = por %p104, %p105
      %p107 = scmp.ne.s32.totalorder %s93, %s94
      %p108 = scmp.eq.s32.totalorder %s18, 1
      %p109 = por %p107, %p108
      %p111 = scmp.ne.s32.totalorder %s94, %s110
      %p112 = scmp.eq.s32.totalorder %s18, 0
      %p113 = por %p111, %p112
      %p114 = scmp.le.s32.totalorder 1, %s12
      %p115 = scmp.lt.s32.totalorder %s12, 3
      %p116 = pnand %p114, %p115
      %p117 = pneg %p116
      // Predicated region
      $region9: #{conv2d.1} parent=5 // pred_check
        _
      $region10: #{conv2d.1} parent=5 // pred_check_branch
        %119 = sbr.rel (%p116) target = $region12
      $region11: #{conv2d.1} parent=5 // pred_region
        %s120 = ssub.s32 %s12, 1
        // Predicated region
        $region13: #{conv2d.1} parent=11 // pred_check
          %p121 = pneg %p59
        $region14: #{conv2d.1} parent=11 // pred_check_branch
          %123 = sbr.rel (%p121) target = $region16
        $region15: #{conv2d.1} parent=11 // pred_region
          _
        $region16: #{conv2d.1} parent=11 // pred_fallthru
          _
        // Predicated region
        $region17: #{conv2d.1} parent=11 // pred_check
          %p124 = pneg %p80
        $region18: #{conv2d.1} parent=11 // pred_check_branch
          %126 = sbr.rel (%p124) target = $region20
        $region19: #{conv2d.1} parent=11 // pred_region
          _
        $region20: #{conv2d.1} parent=11 // pred_fallthru
          _
      $region12: #{conv2d.1} parent=5 // pred_fallthru
        _
      %p127 = scmp.lt.s32.totalorder %s12, 2
      // Predicated region
      $region21: #{conv2d.1} parent=5 // pred_check
        %p128 = pneg %p127
      $region22: #{conv2d.1} parent=5 // pred_check_branch
        %130 = sbr.rel (%p128) target = $region24
      $region23: #{conv2d.1} parent=5 // pred_region
        // Predicated region
        $region25: #{conv2d.1} parent=23 // pred_check
          %p131 = pneg %p32
        $region26: #{conv2d.1} parent=23 // pred_check_branch
          %133 = sbr.rel (%p131) target = $region28
        $region27: #{conv2d.1} parent=23 // pred_region
          %s134 = smul.u32 32, %s12
          %p135 = scmp.lt.s32.totalorder %s134, 63
          %s136 = scalar_select %p135, %s134, 63
          %s137 = smul.addr %s136, 4
          %s138 = scalar_lea.vmem %s0, %s137
          %s139 = smul.u32 32, %s12
        $region28: #{conv2d.1} parent=23 // pred_fallthru
          _
      $region24: #{conv2d.1} parent=5 // pred_fallthru
        _
      %p140 = scmp.le.s32.totalorder 1, %s12
      %p141 = scmp.lt.s32.totalorder %s12, 3
      %p142 = pnand %p140, %p141
      %p143 = pneg %p142
      // Predicated region
      $region29: #{conv2d.1} parent=5 // pred_check
        _
      $region30: #{conv2d.1} parent=5 // pred_check_branch
        %145 = sbr.rel (%p142) target = $region32
      $region31: #{conv2d.1} parent=5 // pred_region
        %s146 = ssub.s32 %s12, 1
        %s147 = smul.u32 32, %s17
        %p148 = scmp.lt.s32.totalorder %s147, 63
        %s149 = scalar_select %p148, %s147, 63
        %s150 = smul.addr %s149, 4
        %s151 = scalar_lea.vmem %s0, %s150
        %p152 = pneg %p38
        %p153 = pneg %p35
        %p154 = pneg %p59
        %p155 = pneg %p56
        %p156 = pneg %p80
        %p157 = pneg %p77
        %p158 = pneg %p106
        %p159 = pneg %p103
        %s160 = sand.u32 %s93, 1
        %s161 = scalar_lea.sflag [#allocation3], %s160
        %s162 = sand.u32 %s93, 1
        %s163 = smul.addr %s162, 256
        %s164 = scalar_lea.vmem [#allocation2], %s163
        %s165 = smul.u32 32, %s17
        %p166 = scmp.lt.s32.totalorder %s165, 63
        %s167 = scalar_select %p166, %s165, 63
        %s168 = smul.addr %s167, 4
        %s169 = scalar_lea.vmem %s0, %s168
        %s170 = smul.u32 32, %s17
        %s171 = smul.u32 32, %s17
        %v173 = vld [vmem:[%s169] sm:$0xf]
        %v174 = vld [vmem:[%s169 + $0x4] sm:$0xf]
        %v175 = vld [vmem:[%s169 + $0x8] sm:$0xf]
        %v176 = vld [vmem:[%s169 + $0xc] sm:$0xf]
        %v177 = vld [vmem:[%s169 + $0x10] sm:$0xf]
        %v178 = vld [vmem:[%s169 + $0x14] sm:$0xf]
        %v179 = vld [vmem:[%s169 + $0x18] sm:$0xf]
        %v180 = vld [vmem:[%s169 + $0x1c] sm:$0xf]
        %v181 = vld [vmem:[%s169 + $0x20] sm:$0xf]
        %v182 = vld [vmem:[%s169 + $0x24] sm:$0xf]
        %v183 = vld [vmem:[%s169 + $0x28] sm:$0xf]
        %v184 = vld [vmem:[%s169 + $0x2c] sm:$0xf]
        %v185 = vld [vmem:[%s169 + $0x30] sm:$0xf]
        %v186 = vld [vmem:[%s169 + $0x34] sm:$0xf]
        %v187 = vld [vmem:[%s169 + $0x38] sm:$0xf]
        %v188 = vld [vmem:[%s169 + $0x3c] sm:$0xf]
        %v189 = vld [vmem:[%s169 + $0x40] sm:$0xf]
        %v190 = vld [vmem:[%s169 + $0x44] sm:$0xf]
        %v191 = vld [vmem:[%s169 + $0x48] sm:$0xf]
        %v192 = vld [vmem:[%s169 + $0x4c] sm:$0xf]
        %v193 = vld [vmem:[%s169 + $0x50] sm:$0xf]
        %v194 = vld [vmem:[%s169 + $0x54] sm:$0xf]
        %v195 = vld [vmem:[%s169 + $0x58] sm:$0xf]
        %v196 = vld [vmem:[%s169 + $0x5c] sm:$0xf]
        %v197 = vld [vmem:[%s169 + $0x60] sm:$0xf]
        %v198 = vld [vmem:[%s169 + $0x64] sm:$0xf]
        %v199 = vld [vmem:[%s169 + $0x68] sm:$0xf]
        %v200 = vld [vmem:[%s169 + $0x6c] sm:$0xf]
        %v201 = vld [vmem:[%s169 + $0x70] sm:$0xf]
        %v202 = vld [vmem:[%s169 + $0x74] sm:$0xf]
        %v203 = vld [vmem:[%s169 + $0x78] sm:$0xf]
        %v204 = vld [vmem:[%s169 + $0x7c] sm:$0xf]
        %v205 = vld [vmem:[%s1] sm:$0xf]
        %v206 = vld [vmem:[%s1 + $0x4] sm:$0xf]
        %v207 = vld [vmem:[%s1 + $0x8] sm:$0xf]
        %v208 = vld [vmem:[%s1 + $0xc] sm:$0x3]
        %v209 = vld [vmem:[%s2] sm:$0x1]
        %v211 = vlaneseq
        %v212 = vshrl.u32 %v211, 7
        %v213 = vsub.s32 0, %v212
        %v214 = vrot.slane %v209, %v213
        %v248 = vunpack.c.l.b16 %v173
        %v249 = vunpack.c.l.b16 %v174
        %v250 = vunpack.c.l.b16 %v175
        %v251 = vunpack.c.l.b16 %v176
        %v252 = vunpack.c.l.b16 %v177
        %v253 = vunpack.c.l.b16 %v178
        %v254 = vunpack.c.l.b16 %v179
        %v255 = vunpack.c.l.b16 %v180
        %v256 = vunpack.c.l.b16 %v181
        %v257 = vunpack.c.l.b16 %v182
        %v258 = vunpack.c.l.b16 %v183
        %v259 = vunpack.c.l.b16 %v184
        %v260 = vunpack.c.l.b16 %v185
        %v261 = vunpack.c.l.b16 %v186
        %v262 = vunpack.c.l.b16 %v187
        %v263 = vunpack.c.l.b16 %v188
        %v264 = vunpack.c.l.b16 %v189
        %v265 = vunpack.c.l.b16 %v190
        %v266 = vunpack.c.l.b16 %v191
        %v267 = vunpack.c.l.b16 %v192
        %v268 = vunpack.c.l.b16 %v193
        %v269 = vunpack.c.l.b16 %v194
        %v270 = vunpack.c.l.b16 %v195
        %v271 = vunpack.c.l.b16 %v196
        %v272 = vunpack.c.l.b16 %v197
        %v273 = vunpack.c.l.b16 %v198
        %v274 = vunpack.c.l.b16 %v199
        %v275 = vunpack.c.l.b16 %v200
        %v276 = vunpack.c.l.b16 %v201
        %v277 = vunpack.c.l.b16 %v202
        %v278 = vunpack.c.l.b16 %v203
        %v279 = vunpack.c.l.b16 %v204
        %v280 = vpack.c.b16 %v249, %v248
        %v281 = vpack.c.b16 %v251, %v250
        %v282 = vpack.c.b16 %v253, %v252
        %v283 = vpack.c.b16 %v255, %v254
        %v284 = vpack.c.b16 %v257, %v256
        %v285 = vpack.c.b16 %v259, %v258
        %v286 = vpack.c.b16 %v261, %v260
        %v287 = vpack.c.b16 %v263, %v262
        %v288 = vpack.c.b16 %v265, %v264
        %v289 = vpack.c.b16 %v267, %v266
        %v290 = vpack.c.b16 %v269, %v268
        %v291 = vpack.c.b16 %v271, %v270
        %v292 = vpack.c.b16 %v273, %v272
        %v293 = vpack.c.b16 %v275, %v274
        %v294 = vpack.c.b16 %v277, %v276
        %v295 = vpack.c.b16 %v279, %v278
        %v300 = vunpack.c.l.b16 %v205
        %v301 = vunpack.c.l.b16 %v206
        %v302 = vunpack.c.l.b16 %v207
        %v303 = vunpack.c.l.b16 %v208
        %v304 = vpack.c.b16 %v301, %v300
        %v305 = vpack.c.b16 %v303, %v302
        %vm307 = vcmask 220160
        %v309 = vsel %vm307, %v280, 0
        %v312 = vsel %vm307, %v281, 0
        %v315 = vsel %vm307, %v282, 0
        %v318 = vsel %vm307, %v283, 0
        %v321 = vsel %vm307, %v284, 0
        %v324 = vsel %vm307, %v285, 0
        %v327 = vsel %vm307, %v286, 0
        %v330 = vsel %vm307, %v287, 0
        %v333 = vsel %vm307, %v288, 0
        %v336 = vsel %vm307, %v289, 0
        %v339 = vsel %vm307, %v290, 0
        %v342 = vsel %vm307, %v291, 0
        %v345 = vsel %vm307, %v292, 0
        %v348 = vsel %vm307, %v293, 0
        %v351 = vsel %vm307, %v294, 0
        %v354 = vsel %vm307, %v295, 0
        %vm356 = vcmask 1044480
        %vm357 = vcmask 1045504
        %v358 = vsel %vm356, 4294967295, 65535
        %v359 = vsel %vm357, %v358, 0
        %v361 = vand.u32 %v305, %v359
        %363 = vmatprep.subr.bf16.mxu0 0
        %364 = vmatpush1.bf16.msra.mxu0 %v304
        %365 = vmatprep.subr.bf16.mxu0 0
        %366 = vmatpush1.bf16.msra.mxu0 %v361
        %367 = vmatprep.subr.bf16.mxu0 0
        %368 = vmatpush1.bf16.msra.mxu0 0
        %369 = vmatprep.subr.bf16.mxu0 0
        %370 = vmatpush1.bf16.msra.mxu0 0
        %371 = vmatprep.subr.bf16.mxu0 0
        %372 = vmatpush1.bf16.msra.mxu0 0
        %373 = vmatprep.subr.bf16.mxu0 0
        %374 = vmatpush1.bf16.msra.mxu0 0
        %375 = vmatprep.subr.bf16.mxu0 0
        %376 = vmatpush1.bf16.msra.mxu0 0
        %377 = vmatprep.subr.bf16.mxu0 0
        %378 = vmatpush1.bf16.msra.mxu0 0
        %379 = vmatprep.subr.bf16.mxu0 0
        %380 = vmatpush1.bf16.msra.mxu0 0
        %381 = vmatprep.subr.bf16.mxu0 0
        %382 = vmatpush1.bf16.msra.mxu0 0
        %383 = vmatprep.subr.bf16.mxu0 0
        %384 = vmatpush1.bf16.msra.mxu0 0
        %385 = vmatprep.subr.bf16.mxu0 0
        %386 = vmatpush1.bf16.msra.mxu0 0
        %387 = vmatprep.subr.bf16.mxu0 0
        %388 = vmatpush1.bf16.msra.mxu0 0
        %389 = vmatprep.subr.bf16.mxu0 0
        %390 = vmatpush1.bf16.msra.mxu0 0
        %391 = vmatprep.subr.bf16.mxu0 0
        %392 = vmatpush1.bf16.msra.mxu0 0
        %393 = vmatprep.subr.bf16.mxu0 0
        %394 = vmatpush1.bf16.msra.mxu0 0
        %395 = vmatprep.mubr.bf16.mxu0 0
        %396 = vmatmul.mubr.bf16.gmra.mrb[0].mxu0 %v309
        %v397 = vpop.f32.mrb[0].mxu0
        %v398 = vadd.f32 %v214, %v397
        %v399 = vpop.f32.mrb[0].mxu0
        %v400 = vpop.f32.mrb[0].mxu0
        %v401 = vadd.f32 %v214, %v400
        %v402 = vpop.f32.mrb[0].mxu0
        %403 = vmatprep.mubr.bf16.mxu0 0
        %404 = vmatmul.mubr.bf16.gmra.mrb[0].mxu0 %v312
        %v405 = vpop.f32.mrb[0].mxu0
        %v406 = vadd.f32 %v214, %v405
        %v407 = vpop.f32.mrb[0].mxu0
        %v408 = vpop.f32.mrb[0].mxu0
        %v409 = vadd.f32 %v214, %v408
        %v410 = vpop.f32.mrb[0].mxu0
        %411 = vmatprep.mubr.bf16.mxu0 0
        %412 = vmatmul.mubr.bf16.gmra.mrb[0].mxu0 %v315
        %v413 = vpop.f32.mrb[0].mxu0
        %v414 = vadd.f32 %v214, %v413
        %v415 = vpop.f32.mrb[0].mxu0
        %v416 = vpop.f32.mrb[0].mxu0
        %v417 = vadd.f32 %v214, %v416
        %v418 = vpop.f32.mrb[0].mxu0
        %419 = vmatprep.mubr.bf16.mxu0 0
        %420 = vmatmul.mubr.bf16.gmra.mrb[0].mxu0 %v318
        %v421 = vpop.f32.mrb[0].mxu0
        %v422 = vadd.f32 %v214, %v421
        %v423 = vpop.f32.mrb[0].mxu0
        %v424 = vpop.f32.mrb[0].mxu0
        %v425 = vadd.f32 %v214, %v424
        %v426 = vpop.f32.mrb[0].mxu0
        %427 = vmatprep.mubr.bf16.mxu0 0
        %428 = vmatmul.mubr.bf16.gmra.mrb[0].mxu0 %v321
        %v429 = vpop.f32.mrb[0].mxu0
        %v430 = vadd.f32 %v214, %v429
        %v431 = vpop.f32.mrb[0].mxu0
        %v432 = vpop.f32.mrb[0].mxu0
        %v433 = vadd.f32 %v214, %v432
        %v434 = vpop.f32.mrb[0].mxu0
        %435 = vmatprep.mubr.bf16.mxu0 0
        %436 = vmatmul.mubr.bf16.gmra.mrb[0].mxu0 %v324
        %v437 = vpop.f32.mrb[0].mxu0
        %v438 = vadd.f32 %v214, %v437
        %v439 = vpop.f32.mrb[0].mxu0
        %v440 = vpop.f32.mrb[0].mxu0
        %v441 = vadd.f32 %v214, %v440
        %v442 = vpop.f32.mrb[0].mxu0
        %443 = vmatprep.mubr.bf16.mxu0 0
        %444 = vmatmul.mubr.bf16.gmra.mrb[0].mxu0 %v327
        %v445 = vpop.f32.mrb[0].mxu0
        %v446 = vadd.f32 %v214, %v445
        %v447 = vpop.f32.mrb[0].mxu0
        %v448 = vpop.f32.mrb[0].mxu0
        %v449 = vadd.f32 %v214, %v448
        %v450 = vpop.f32.mrb[0].mxu0
        %451 = vmatprep.mubr.bf16.mxu0 0
        %452 = vmatmul.mubr.bf16.gmra.mrb[0].mxu0 %v330
        %v453 = vpop.f32.mrb[0].mxu0
        %v454 = vadd.f32 %v214, %v453
        %v455 = vpop.f32.mrb[0].mxu0
        %v456 = vpop.f32.mrb[0].mxu0
        %v457 = vadd.f32 %v214, %v456
        %v458 = vpop.f32.mrb[0].mxu0
        %459 = vmatprep.mubr.bf16.mxu0 0
        %460 = vmatmul.mubr.bf16.gmra.mrb[0].mxu0 %v333
        %v461 = vpop.f32.mrb[0].mxu0
        %v462 = vadd.f32 %v214, %v461
        %v463 = vpop.f32.mrb[0].mxu0
        %v464 = vpop.f32.mrb[0].mxu0
        %v465 = vadd.f32 %v214, %v464
        %v466 = vpop.f32.mrb[0].mxu0
        %467 = vmatprep.mubr.bf16.mxu0 0
        %468 = vmatmul.mubr.bf16.gmra.mrb[0].mxu0 %v336
        %v469 = vpop.f32.mrb[0].mxu0
        %v470 = vadd.f32 %v214, %v469
        %v471 = vpop.f32.mrb[0].mxu0
        %v472 = vpop.f32.mrb[0].mxu0
        %v473 = vadd.f32 %v214, %v472
        %v474 = vpop.f32.mrb[0].mxu0
        %475 = vmatprep.mubr.bf16.mxu0 0
        %476 = vmatmul.mubr.bf16.gmra.mrb[0].mxu0 %v339
        %v477 = vpop.f32.mrb[0].mxu0
        %v478 = vadd.f32 %v214, %v477
        %v479 = vpop.f32.mrb[0].mxu0
        %v480 = vpop.f32.mrb[0].mxu0
        %v481 = vadd.f32 %v214, %v480
        %v482 = vpop.f32.mrb[0].mxu0
        %483 = vmatprep.mubr.bf16.mxu0 0
        %484 = vmatmul.mubr.bf16.gmra.mrb[0].mxu0 %v342
        %v485 = vpop.f32.mrb[0].mxu0
        %v486 = vadd.f32 %v214, %v485
        %v487 = vpop.f32.mrb[0].mxu0
        %v488 = vpop.f32.mrb[0].mxu0
        %v489 = vadd.f32 %v214, %v488
        %v490 = vpop.f32.mrb[0].mxu0
        %491 = vmatprep.mubr.bf16.mxu0 0
        %492 = vmatmul.mubr.bf16.gmra.mrb[0].mxu0 %v345
        %v493 = vpop.f32.mrb[0].mxu0
        %v494 = vadd.f32 %v214, %v493
        %v495 = vpop.f32.mrb[0].mxu0
        %v496 = vpop.f32.mrb[0].mxu0
        %v497 = vadd.f32 %v214, %v496
        %v498 = vpop.f32.mrb[0].mxu0
        %499 = vmatprep.mubr.bf16.mxu0 0
        %500 = vmatmul.mubr.bf16.gmra.mrb[0].mxu0 %v348
        %v501 = vpop.f32.mrb[0].mxu0
        %v502 = vadd.f32 %v214, %v501
        %v503 = vpop.f32.mrb[0].mxu0
        %v504 = vpop.f32.mrb[0].mxu0
        %v505 = vadd.f32 %v214, %v504
        %v506 = vpop.f32.mrb[0].mxu0
        %507 = vmatprep.mubr.bf16.mxu0 0
        %508 = vmatmul.mubr.bf16.gmra.mrb[0].mxu0 %v351
        %v509 = vpop.f32.mrb[0].mxu0
        %v510 = vadd.f32 %v214, %v509
        %v511 = vpop.f32.mrb[0].mxu0
        %v512 = vpop.f32.mrb[0].mxu0
        %v513 = vadd.f32 %v214, %v512
        %v514 = vpop.f32.mrb[0].mxu0
        %515 = vmatprep.mubr.bf16.mxu0 0
        %516 = vmatmul.mubr.bf16.gmra.mrb[0].mxu0 %v354
        %v517 = vpop.f32.mrb[0].mxu0
        %v518 = vadd.f32 %v214, %v517
        %v519 = vpop.f32.mrb[0].mxu0
        %v520 = vpop.f32.mrb[0].mxu0
        %v521 = vadd.f32 %v214, %v520
        %v522 = vpop.f32.mrb[0].mxu0
        %523 = vdwg.mxu0
        %vm524 = vcmask 130048
        %525 = vst.msk [vmem:[%s164] sm:$0xff] %vm524, %v398
        %526 = vst.msk [vmem:[%s164 + $0x8] sm:$0xff] %vm524, %v401
        %527 = vst.msk [vmem:[%s164 + $0x10] sm:$0xff] %vm524, %v406
        %528 = vst.msk [vmem:[%s164 + $0x18] sm:$0xff] %vm524, %v409
        %529 = vst.msk [vmem:[%s164 + $0x20] sm:$0xff] %vm524, %v414
        %530 = vst.msk [vmem:[%s164 + $0x28] sm:$0xff] %vm524, %v417
        %531 = vst.msk [vmem:[%s164 + $0x30] sm:$0xff] %vm524, %v422
        %532 = vst.msk [vmem:[%s164 + $0x38] sm:$0xff] %vm524, %v425
        %533 = vst.msk [vmem:[%s164 + $0x40] sm:$0xff] %vm524, %v430
        %534 = vst.msk [vmem:[%s164 + $0x48] sm:$0xff] %vm524, %v433
        %535 = vst.msk [vmem:[%s164 + $0x50] sm:$0xff] %vm524, %v438
        %536 = vst.msk [vmem:[%s164 + $0x58] sm:$0xff] %vm524, %v441
        %537 = vst.msk [vmem:[%s164 + $0x60] sm:$0xff] %vm524, %v446
        %538 = vst.msk [vmem:[%s164 + $0x68] sm:$0xff] %vm524, %v449
        %539 = vst.msk [vmem:[%s164 + $0x70] sm:$0xff] %vm524, %v454
        %540 = vst.msk [vmem:[%s164 + $0x78] sm:$0xff] %vm524, %v457
        %541 = vst.msk [vmem:[%s164 + $0x80] sm:$0xff] %vm524, %v462
        %542 = vst.msk [vmem:[%s164 + $0x88] sm:$0xff] %vm524, %v465
        %543 = vst.msk [vmem:[%s164 + $0x90] sm:$0xff] %vm524, %v470
        %544 = vst.msk [vmem:[%s164 + $0x98] sm:$0xff] %vm524, %v473
        %545 = vst.msk [vmem:[%s164 + $0xa0] sm:$0xff] %vm524, %v478
        %546 = vst.msk [vmem:[%s164 + $0xa8] sm:$0xff] %vm524, %v481
        %547 = vst.msk [vmem:[%s164 + $0xb0] sm:$0xff] %vm524, %v486
        %548 = vst.msk [vmem:[%s164 + $0xb8] sm:$0xff] %vm524, %v489
        %549 = vst.msk [vmem:[%s164 + $0xc0] sm:$0xff] %vm524, %v494
        %550 = vst.msk [vmem:[%s164 + $0xc8] sm:$0xff] %vm524, %v497
        %551 = vst.msk [vmem:[%s164 + $0xd0] sm:$0xff] %vm524, %v502
        %552 = vst.msk [vmem:[%s164 + $0xd8] sm:$0xff] %vm524, %v505
        %553 = vst.msk [vmem:[%s164 + $0xe0] sm:$0xff] %vm524, %v510
        %554 = vst.msk [vmem:[%s164 + $0xe8] sm:$0xff] %vm524, %v513
        %555 = vst.msk [vmem:[%s164 + $0xf0] sm:$0xff] %vm524, %v518
        %556 = vst.msk [vmem:[%s164 + $0xf8] sm:$0xff] %vm524, %v521
        %s557 = sand.u32 %s93, 1
        %s558 = scalar_lea.sflag [#allocation3], %s557
        %s559 = sand.u32 %s93, 1
        %s560 = smul.addr %s559, 256
        %s561 = scalar_lea.vmem [#allocation2], %s560
        // Predicated region
        $region33: #{conv2d.1} parent=31 // pred_check
          %p562 = pneg %p103
        $region34: #{conv2d.1} parent=31 // pred_check_branch
          %564 = sbr.rel (%p562) target = $region36
        $region35: #{conv2d.1} parent=31 // pred_region
          %s565 = smul.u32 32, %s17
          %s567 = ssub.s32 4096, 4096
          %568 = vsyncadd %s558, %s567
          %s569 = smul.addr %s565, 128
          %s570 = scalar_lea.hbm %s3, %s569
          %s571 = sshll.u32 %s561, 4
          %s572 = int_to_ptr.vmem [resolvable:$true] %s571
          %577 = dma.vmem_to_hbm [thread:$0]  %s572, 4096, %s570, %s558, 128, 128, 8
        $region36: #{conv2d.1} parent=31 // pred_fallthru
          _
      $region32: #{conv2d.1} parent=5 // pred_fallthru
        _
      %p578 = scmp.le.s32.totalorder 2, %s12
      // Predicated region
      $region37: #{conv2d.1} parent=5 // pred_check
        %p579 = pneg %p578
      $region38: #{conv2d.1} parent=5 // pred_check_branch
        %581 = sbr.rel (%p579) target = $region40
      $region39: #{conv2d.1} parent=5 // pred_region
        %s582 = ssub.s32 %s12, 2
        // Predicated region
        $region41: #{conv2d.1} parent=39 // pred_check
          %p583 = pneg %p109
        $region42: #{conv2d.1} parent=39 // pred_check_branch
          %585 = sbr.rel (%p583) target = $region44
        $region43: #{conv2d.1} parent=39 // pred_region
          %s586 = sand.u32 %s94, 1
          %s587 = scalar_lea.sflag [#allocation3], %s586
          %s588 = sand.u32 %s94, 1
          %s589 = smul.addr %s588, 256
          %s590 = scalar_lea.vmem [#allocation2], %s589
          %591 = dma.done %s587, 4096
        $region44: #{conv2d.1} parent=39 // pred_fallthru
          _
      $region40: #{conv2d.1} parent=5 // pred_fallthru
        _
    $region6: #{conv2d.1} parent=1 // loop_footer
      %s16 = sadd.s32 1, %s12
    $region7: #{conv2d.1} parent=1 // loop_footer_branch
      %11 = sbr.rel target = $region3
    $region8: #{conv2d.1} parent=1 // loop_exit
      _
    %592 = vsyncpa [#allocation3], 1
    %s593 = scalar_lea.sflag [#allocation3], 1
    %594 = vsyncpa %s593, 1

</llo_original>
